<compile_context>
chip_gen: v6e
topology: v6e:2x2x1
jax: 0.10.0
libtpu: 0.0.40
codegen_flags: <defaults>
</compile_context>

<pallas_src>
import functools

import jax
import jax.numpy as jnp
from jax.experimental import pallas as pl
from jax.experimental.pallas import tpu as pltpu


def _ntxent_kernel(q_ref, p_ref, q3_ref, neg_ref, loss_ref, negacc_ref, *,
                   inv_temp):
    """One (batch-tile, negatives-tile) grid step."""
    n_step = pl.program_id(1)

    @pl.when(n_step == 0)
    def _init():
        negacc_ref[...] = jnp.zeros_like(negacc_ref)

    # --- negative branch on the MXU -----------------------------------------
    # neg (tb, tn, D) streams as LHS (contraction dim D already in lanes, no
    # relayout of the dominant tile); q3 (tb, 1, D) is the tiny stationary RHS.
    scores = jnp.einsum(
        "bnd,bqd->bnq",
        neg_ref[...], q3_ref[...],
        preferred_element_type=jnp.float32,
        precision=jax.lax.Precision.HIGHEST,
    )                                                        # (tb, tn, 1) f32
    # TODO(synk): an online running-max (stable LSE across N tiles) would add
    # overflow robustness for unnormalized inputs / tiny temperatures; omitted
    # to match the naive reference module exactly.
    negacc_ref[...] += jnp.sum(jnp.exp(scores * inv_temp), axis=1)   # (tb, 1)

    # --- positive branch + per-sample loss (last N step only) ---------------
    @pl.when(n_step == pl.num_programs(1) - 1)
    def _finalize():
        q = q_ref[...].astype(jnp.float32)                   # (tb, D)
        p = p_ref[...].astype(jnp.float32)                   # (tb, D)
        q_sq = jnp.sum(q * q, axis=-1, keepdims=True)        # (tb, 1)
        p_sq = jnp.sum(p * p, axis=-1, keepdims=True)        # (tb, 1)
        qp = jnp.sum(q * p, axis=-1, keepdims=True)          # (tb, 1)
        # cos = q.p / max(||q||*||p||, 1e-8)  (torch cosine_similarity)
        inv_norm = jax.lax.rsqrt(jnp.maximum(q_sq * p_sq, 1e-16))
        logit_pos = qp * inv_norm * inv_temp                  # (tb, 1)
        # -log(pos / (pos + neg)) == log(exp(logit_pos) + neg_sum) - logit_pos
        loss_ref[...] = (jnp.log(jnp.exp(logit_pos) + negacc_ref[...])
                         - logit_pos)


# ---------------------------------------------------------------------------
# Tile selection (padded-layout, generation-aware VMEM accounting)
# ---------------------------------------------------------------------------
def _roundup(x, m):
    return -(-x // m) * m


def _tile_candidates(dim):
    cands = {t for t in range(8, dim + 1, 8) if dim % t == 0}
    cands.add(dim)                      # full-extent block is always legal
    return sorted(cands)


def _vmem_capacity_bytes():
    try:
        cap = getattr(pltpu.get_tpu_info(), "vmem_capacity_bytes", None)
        if cap:
            return int(cap)
    except Exception:
        pass
    return 64 * 1024 * 1024             # conservative fallback (v7x per-TC)


def _footprint_bytes(tb, tn, D, in_itemsize):
    """Padded VMEM footprint of one pipelined step: double-buffered inputs,
    output block, scratch, and the main intermediates; last dim rounded to
    128 lanes, second-to-last to 8 sublanes."""
    d_pad = _roundup(D, 128)
    f32 = 4
    neg = tb * _roundup(tn, 8) * d_pad * in_itemsize          # (tb, tn, D)
    q2d = _roundup(tb, 8) * d_pad * in_itemsize               # (tb, D)
    q3d = tb * 8 * d_pad * in_itemsize                        # (tb, 1, D)
    out = _roundup(tb, 8) * 128 * f32                         # (tb, 1)
    scratch = _roundup(tb, 8) * 128 * f32                     # negacc
    scores = tb * _roundup(tn, 8) * 128 * f32                 # (tb, tn, 1)
    pos_tmp = 4 * _roundup(tb, 8) * d_pad * f32               # q*q, p*p, q*p..
    fixed = 2 * 1024 * 1024                                   # Mosaic internal
    return (2 * neg + 2 * 2 * q2d + 2 * q3d + 2 * out
            + scratch + 2 * scores + pos_tmp + fixed)


def _choose_tiles(B, N, D, in_itemsize, budget_bytes):
    """Largest (block_b, block_n) whose padded, double-buffered working set
    fits the budget; prefers the fewest grid steps (max block_b*block_n)."""
    best = None
    for tn in _tile_candidates(N):
        for tb in _tile_candidates(B):
            if _footprint_bytes(tb, tn, D, in_itemsize) <= budget_bytes:
                key = (tb * tn, tn)
                if best is None or key > best[0]:
                    best = (key, (tb, tn))
    if best is not None:
        return best[1]
    # Nothing fits the budget: smallest legal tiles (may spill but compiles).
    return min(_tile_candidates(B)), min(_tile_candidates(N))


# ---------------------------------------------------------------------------
# Wrapper
# ---------------------------------------------------------------------------
def ntxent_loss(query_embeddings, pos_embeddings, neg_embeddings,
                temperature=0.2, block_b=None, block_n=None):
    B, D = query_embeddings.shape
    Bn, N, Dn = neg_embeddings.shape
    assert (Bn, Dn) == (B, D)

    vmem_cap = _vmem_capacity_bytes()
    # ~45% of physical VMEM for the double-buffered working set:
    # ~58 MiB on v5e/v6e (128 MiB), ~29 MiB on v7x (64 MiB per TensorCore).
    budget = int(0.45 * vmem_cap)
    in_itemsize = jnp.dtype(neg_embeddings.dtype).itemsize
    auto_b, auto_n = _choose_tiles(B, N, D, in_itemsize, budget)
    block_b = auto_b if block_b is None else block_b
    block_n = auto_n if block_n is None else block_n
    assert B % block_b == 0 and N % block_n == 0
    assert block_b % 8 == 0 or block_b == B, "(8,128) rule on (tb, D) blocks"
    assert block_n % 8 == 0 or block_n == N, "(8,128) rule on (tn, D) blocks"

    # Raise the scoped-VMEM limit (defaults are only 16/32 MiB) so the chosen
    # tile actually fits; keep headroom under physical capacity.
    footprint = _footprint_bytes(block_b, block_n, D, in_itemsize)
    vmem_limit = int(min(vmem_cap - (2 << 20),
                         max(3 * vmem_cap // 4, footprint + (4 << 20))))

    # (B, 1, D) view of q used as the stationary batched-matmul RHS.  Kept as
    # a wrapper-side reshape (tiny vs. neg bytes) so no in-kernel relayout of
    # q is needed and the contraction keeps a known-good rank-3 einsum form.
    q3 = query_embeddings.reshape(B, 1, D)

    kernel = functools.partial(_ntxent_kernel,
                               inv_temp=float(1.0 / float(temperature)))

    grid = (B // block_b, N // block_n)
    per_sample = pl.pallas_call(
        kernel,
        out_shape=jax.ShapeDtypeStruct((B, 1), jnp.float32),
        grid_spec=pltpu.PrefetchScalarGridSpec(
            num_scalar_prefetch=0,
            grid=grid,
            in_specs=[
                pl.BlockSpec((block_b, D), lambda i, n: (i, 0)),              # q
                pl.BlockSpec((block_b, D), lambda i, n: (i, 0)),              # p
                pl.BlockSpec((block_b, 1, D), lambda i, n: (i, 0, 0)),        # q3
                pl.BlockSpec((block_b, block_n, D), lambda i, n: (i, n, 0)),  # neg
            ],
            out_specs=pl.BlockSpec((block_b, 1), lambda i, n: (i, 0)),
            scratch_shapes=[pltpu.VMEM((block_b, 1), jnp.float32)],
        ),
        compiler_params=pltpu.CompilerParams(
            dimension_semantics=("parallel", "arbitrary"),
            vmem_limit_bytes=vmem_limit,
        ),
    )(query_embeddings, pos_embeddings, q3, neg_embeddings)

    # Per-sample losses -> scalar mean (tiny XLA reduction in the wrapper).
    return jnp.mean(per_sample)


# ---------------------------------------------------------------------------
# Pure-JAX reference (mirrors the PyTorch module) + self-test
# ---------------------------------------------------------------------------
def _reference(q, p, neg, temperature=0.2):
    qn = jnp.linalg.norm(q, axis=-1)
    pn = jnp.linalg.norm(p, axis=-1)
    cos = jnp.sum(q * p, axis=-1) / jnp.maximum(qn * pn, 1e-8)
    pos = jnp.exp(cos / temperature)
    scores = jnp.einsum("bd,bnd->bn", q, neg,
                        precision=jax.lax.Precision.HIGHEST)
    neg_s = jnp.sum(jnp.exp(scores / temperature), axis=-1)
    return -jnp.mean(jnp.log(pos / (pos + neg_s)))


if __name__ == "__main__":
    B, N, D = 16, 16, 32
    key = jax.random.PRNGKey(0)
    kq, kp, kn = jax.random.split(key, 3)

    def unit(x):
        return x / jnp.linalg.norm(x, axis=-1, keepdims=True)

    # NT-Xent normally runs on L2-normalized embeddings; unit norms also keep
    # exp(score / 0.2) well inside the float32 range (naive, reference-exact LSE).
    query = unit(jax.random.normal(kq, (B, D), dtype=jnp.float32))
    pos = unit(jax.random.normal(kp, (B, D), dtype=jnp.float32))
    neg = unit(jax.random.normal(kn, (B, N, D), dtype=jnp.float32))

    ref = _reference(query, pos, neg, temperature=0.2)

    # Multi-step grid on both axes (2 batch tiles x 2 negatives tiles):
    # exercises the resident per-row accumulator and the per-tile output path.
    loss = ntxent_loss(query, pos, neg, temperature=0.2, block_b=8, block_n=8)
    jax.block_until_ready(loss)
    assert jnp.allclose(loss, ref, rtol=1e-5, atol=1e-5), (loss, ref)

    # Auto-picked tiles (single grid step at this size).
    loss_auto = ntxent_loss(query, pos, neg, temperature=0.2)
    jax.block_until_ready(loss_auto)
    assert jnp.allclose(loss_auto, ref, rtol=1e-5, atol=1e-5), (loss_auto, ref)

    print("KERNEL_OK")
</pallas_src>

<mosaic_0001>
module attributes {stable_mosaic.version = 11 : i64} {
  func.func @_ntxent_kernel(%arg0: i32, %arg1: i32, %arg2: memref<8x32xf32, #tpu.memory_space<vmem>>, %arg3: memref<8x32xf32, #tpu.memory_space<vmem>>, %arg4: memref<8x1x32xf32, #tpu.memory_space<vmem>>, %arg5: memref<8x8x32xf32, #tpu.memory_space<vmem>>, %arg6: memref<8x1xf32, #tpu.memory_space<vmem>>, %arg7: memref<8x1xf32, #tpu.memory_space<vmem>>) attributes {dimension_semantics = [#tpu.dimension_semantics<parallel>, #tpu.dimension_semantics<arbitrary>], iteration_bounds = array<i64: 2, 2>, scalar_prefetch = 0 : i64, scratch_operands = 1 : i64, tpu.core_type = #tpu.core_type<tc>, window_params = [{transform_indices = @transform_0, window_bounds = array<i64: 8, 32>}, {transform_indices = @transform_1, window_bounds = array<i64: 8, 32>}, {transform_indices = @transform_2, window_bounds = array<i64: 8, 1, 32>}, {transform_indices = @transform_3, window_bounds = array<i64: 8, 8, 32>}, {transform_indices = @transform_4, window_bounds = array<i64: 8, 1>}]} {
    %c0_i32 = arith.constant 0 : i32
    %0 = arith.cmpi eq, %arg1, %c0_i32 : i32
    %1 = arith.extui %0 : i1 to i32
    %c0_i32_0 = arith.constant 0 : i32
    %2 = arith.cmpi ne, %1, %c0_i32_0 : i32
    scf.if %2 {
      %cst_13 = arith.constant 0.000000e+00 : f32
      %16 = vector.broadcast %cst_13 : f32 to vector<8x1xf32>
      %c0_14 = arith.constant 0 : index
      %c0_15 = arith.constant 0 : index
      %17 = vector.load %arg7[%c0_14, %c0_15] : memref<8x1xf32, #tpu.memory_space<vmem>>, vector<8x1xf32>
      tpu.vector_store %arg7[%c0_14, %c0_15], %16 {strides = array<i32>} : memref<8x1xf32, #tpu.memory_space<vmem>>, vector<8x1xf32>,
    } else {
    }
    %c0 = arith.constant 0 : index
    %c0_1 = arith.constant 0 : index
    %c0_2 = arith.constant 0 : index
    %3 = vector.load %arg5[%c0, %c0_1, %c0_2] : memref<8x8x32xf32, #tpu.memory_space<vmem>>, vector<8x8x32xf32>
    %c0_3 = arith.constant 0 : index
    %c0_4 = arith.constant 0 : index
    %c0_5 = arith.constant 0 : index
    %4 = vector.load %arg4[%c0_3, %c0_4, %c0_5] : memref<8x1x32xf32, #tpu.memory_space<vmem>>, vector<8x1x32xf32>
    "tpu.trace_start"() <{level = 10 : i32, message = "bnd,bqd->bnq"}> : () -> ()
    %cst = arith.constant dense<0.000000e+00> : vector<8x8x1xf32>
    %5 = tpu.matmul %3, %4, %cst {dimension_numbers = #tpu.dot_dimension_numbers<[2], [2], [1], [1], [0, 0, 0, 1, 1, 1], [0], [0]>, precision = #tpu.contract_precision<fp32>} : vector<8x8x32xf32>, vector<8x1x32xf32>, vector<8x8x1xf32> -> vector<8x8x1xf32>
    "tpu.trace_stop"() : () -> ()
    %c0_6 = arith.constant 0 : index
    %c0_7 = arith.constant 0 : index
    %6 = vector.load %arg7[%c0_6, %c0_7] : memref<8x1xf32, #tpu.memory_space<vmem>>, vector<8x1xf32>
    %cst_8 = arith.constant 5.000000e+00 : f32
    %7 = vector.broadcast %cst_8 : f32 to vector<8x8x1xf32>
    %8 = arith.mulf %5, %7 : vector<8x8x1xf32>
    %9 = math.exp %8 : vector<8x8x1xf32>
    %cst_9 = arith.constant dense<0.000000e+00> : vector<8x1xf32>
    %10 = vector.multi_reduction <add>, %9, %cst_9 [1] : vector<8x8x1xf32> to vector<8x1xf32>
    %11 = arith.addf %6, %10 : vector<8x1xf32>
    %c0_10 = arith.constant 0 : index
    %c0_11 = arith.constant 0 : index
    %12 = vector.load %arg7[%c0_10, %c0_11] : memref<8x1xf32, #tpu.memory_space<vmem>>, vector<8x1xf32>
    tpu.vector_store %arg7[%c0_10, %c0_11], %11 {strides = array<i32>} : memref<8x1xf32, #tpu.memory_space<vmem>>, vector<8x1xf32>,
    %c1_i32 = arith.constant 1 : i32
    %13 = arith.cmpi eq, %arg1, %c1_i32 : i32
    %14 = arith.extui %13 : i1 to i32
    %c0_i32_12 = arith.constant 0 : i32
    %15 = arith.cmpi ne, %14, %c0_i32_12 : i32
    scf.if %15 {
      %c0_13 = arith.constant 0 : index
      %c0_14 = arith.constant 0 : index
      %16 = vector.load %arg2[%c0_13, %c0_14] : memref<8x32xf32, #tpu.memory_space<vmem>>, vector<8x32xf32>
      %c0_15 = arith.constant 0 : index
      %c0_16 = arith.constant 0 : index
      %17 = vector.load %arg3[%c0_15, %c0_16] : memref<8x32xf32, #tpu.memory_space<vmem>>, vector<8x32xf32>
      %18 = arith.mulf %16, %16 : vector<8x32xf32>
      %cst_17 = arith.constant dense<0.000000e+00> : vector<8xf32>
      %19 = vector.multi_reduction <add>, %18, %cst_17 [1] : vector<8x32xf32> to vector<8xf32>
      %20 = vector.shape_cast %19 : vector<8xf32> to vector<8x1xf32>
      %21 = arith.mulf %17, %17 : vector<8x32xf32>
      %cst_18 = arith.constant dense<0.000000e+00> : vector<8xf32>
      %22 = vector.multi_reduction <add>, %21, %cst_18 [1] : vector<8x32xf32> to vector<8xf32>
      %23 = vector.shape_cast %22 : vector<8xf32> to vector<8x1xf32>
      %24 = arith.mulf %16, %17 : vector<8x32xf32>
      %cst_19 = arith.constant dense<0.000000e+00> : vector<8xf32>
      %25 = vector.multi_reduction <add>, %24, %cst_19 [1] : vector<8x32xf32> to vector<8xf32>
      %26 = vector.shape_cast %25 : vector<8xf32> to vector<8x1xf32>
      %27 = arith.mulf %20, %23 : vector<8x1xf32>
      %cst_20 = arith.constant 1.000000e-16 : f32
      %28 = vector.broadcast %cst_20 : f32 to vector<8x1xf32>
      %29 = arith.maximumf %27, %28 : vector<8x1xf32>
      %30 = math.rsqrt %29 : vector<8x1xf32>
      %31 = arith.mulf %26, %30 : vector<8x1xf32>
      %cst_21 = arith.constant 5.000000e+00 : f32
      %32 = vector.broadcast %cst_21 : f32 to vector<8x1xf32>
      %33 = arith.mulf %31, %32 : vector<8x1xf32>
      %34 = math.exp %33 : vector<8x1xf32>
      %c0_22 = arith.constant 0 : index
      %c0_23 = arith.constant 0 : index
      %35 = vector.load %arg7[%c0_22, %c0_23] : memref<8x1xf32, #tpu.memory_space<vmem>>, vector<8x1xf32>
      %36 = arith.addf %34, %35 : vector<8x1xf32>
      %37 = math.log %36 : vector<8x1xf32>
      %38 = arith.subf %37, %33 : vector<8x1xf32>
      %c0_24 = arith.constant 0 : index
      %c0_25 = arith.constant 0 : index
      %39 = vector.load %arg6[%c0_24, %c0_25] : memref<8x1xf32, #tpu.memory_space<vmem>>, vector<8x1xf32>
      tpu.vector_store %arg6[%c0_24, %c0_25], %38 {strides = array<i32>} : memref<8x1xf32, #tpu.memory_space<vmem>>, vector<8x1xf32>,
    } else {
    }
    return
  }
  func.func @transform_0(%arg0: i32, %arg1: i32) -> (i32, i32) {
    %c0_i32 = arith.constant 0 : i32
    %c0_i32_0 = arith.constant 0 : i32
    return %arg0, %c0_i32 : i32, i32
  }
  func.func @transform_1(%arg0: i32, %arg1: i32) -> (i32, i32) {
    %c0_i32 = arith.constant 0 : i32
    %c0_i32_0 = arith.constant 0 : i32
    return %arg0, %c0_i32 : i32, i32
  }
  func.func @transform_2(%arg0: i32, %arg1: i32) -> (i32, i32, i32) {
    %c0_i32 = arith.constant 0 : i32
    %c0_i32_0 = arith.constant 0 : i32
    %c0_i32_1 = arith.constant 0 : i32
    return %arg0, %c0_i32, %c0_i32_0 : i32, i32, i32
  }
  func.func @transform_3(%arg0: i32, %arg1: i32) -> (i32, i32, i32) {
    %c0_i32 = arith.constant 0 : i32
    %c0_i32_0 = arith.constant 0 : i32
    return %arg0, %arg1, %c0_i32 : i32, i32, i32
  }
  func.func @transform_4(%arg0: i32, %arg1: i32) -> (i32, i32) {
    %c0_i32 = arith.constant 0 : i32
    %c0_i32_0 = arith.constant 0 : i32
    return %arg0, %c0_i32 : i32, i32
  }
}

</mosaic_0001>

<llo_original>
// kernel: tpu_custom_call.1
$region0: #{tpu_custom_call.1}
  #allocation0 [shape = 'u32[]', space=smem, size = 0x4, offset = 0x4, fixed_abs, tag = 'smem constant byte address 0x4 - core index']
  #allocation1 [shape = 'u32[144,128]{1,0:T(1,128)}', space=vmem, size = 0x12000, scoped, tag = 'internal scratch']
  #allocation2 [shape = 'f32[8,1]{1,0:T(8,128)}', space=vmem, size = 0x1000, scoped, tag = 'scratch operand']
  %s0 = inlined_call_operand.hbm [shape: f32[16,32], index: 0, kind: input, shape index: {}]
  %s1 = inlined_call_operand.hbm [shape: f32[16,32], index: 1, kind: input, shape index: {}]
  %s2 = inlined_call_operand.hbm [shape: f32[16,1,32], index: 2, kind: input, shape index: {}]
  %s3 = inlined_call_operand.hbm [shape: f32[16,16,32], index: 3, kind: input, shape index: {}]
  %s4 = inlined_call_operand.vmem [shape: f32[16,1], index: 4, kind: output, shape index: {}]
  %s5 = sld [smem:[#allocation0]]
  $region73: #{tpu_custom_call.1} parent=0
    _
  %s7 = ssub.s32 1, %s5
  %s8 = scalar_select 0, %s7, %s5
  $region1: #{tpu_custom_call.1} parent=0
    #allocation3 [shape = 'u8[8192]{0}', space=vmem, size = 0x2000, scoped, tag = 'input window, operand 0']
    #allocation4 [shape = 's32[2]{0}', space=sflag, size = 0x8, scoped, tag = 'scoped memory for tpu_custom_call.1']
    #allocation5 [shape = 'u8[8192]{0}', space=vmem, size = 0x2000, scoped, tag = 'input window, operand 1']
    #allocation6 [shape = 's32[2]{0}', space=sflag, size = 0x8, scoped, tag = 'scoped memory for tpu_custom_call.1']
    #allocation7 [shape = 'u8[8192]{0}', space=vmem, size = 0x2000, scoped, tag = 'input window, operand 2']
    #allocation8 [shape = 'u8[65536]{0}', space=vmem, size = 0x10000, scoped, tag = 'input window, operand 3']
    #allocation9 [shape = 's32[2]{0}', space=sflag, size = 0x8, scoped, tag = 'scoped memory for tpu_custom_call.1']
    %9 = vsyncpa [#allocation4], 0
    %s10 = scalar_lea.sflag [#allocation4], 1
    %11 = vsyncpa %s10, 0
    %12 = vsyncpa [#allocation6], 0
    %s13 = scalar_lea.sflag [#allocation6], 1
    %14 = vsyncpa %s13, 0
    %15 = vsyncpa [#allocation9], 0
    %s16 = scalar_lea.sflag [#allocation9], 1
    %17 = vsyncpa %s16, 0
    loop: start=0, step=1, limit=6
    $region2: #{tpu_custom_call.1} parent=1 // loop_pre_header
      _
    $region3: #{tpu_custom_call.1} parent=1 // loop_header
      %s19 = sphi 0, %s23
      %p20 = scmp.ge.s32.totalorder %s19, 6
      %s26 = sphi 0, %s38
      %s27 = sphi 0, %s34
      %s28 = sphi 0, %s26
      %s29 = sphi 0, %s27
      %s30 = sphi 0, %s28
      %s31 = sphi 0, %s29
      %s41 = sphi 0, %s43
      %s44 = sphi 0, %s41
      %s45 = sphi 0, %s44
      %s61 = sphi 0, %s45
      %s67 = sphi 0, %s69
      %s70 = sphi 0, %s67
      %s71 = sphi 0, %s70
      %s87 = sphi 0, %s71
      %s93 = sphi 0, %s95
      %s96 = sphi 0, %s93
      %s97 = sphi 0, %s96
      %s113 = sphi 0, %s97
      %s121 = sphi 0, %s123
      %s124 = sphi 0, %s121
      %s125 = sphi 0, %s124
      %s141 = sphi 0, %s125
      %s147 = sphi 0, %s149
      %s150 = sphi 0, %s147
      %s151 = sphi 0, %s150
      %s167 = sphi 0, %s151
    $region4: #{tpu_custom_call.1} parent=1 // loop_header_branch
      %22 = sbr.rel (%p20) target = $region8
    $region5: #{tpu_custom_call.1} parent=1 // loop_body
      %s24 = ssub.s32 %s19, 1
      %s25 = ssub.s32 %s19, 2
      %s32 = sadd.s32 1, %s27
      %p33 = scmp.ge.s32.totalorder %s32, 2
      %s34 = scalar_select %p33, 0, %s32
      %s35 = sadd.s32 1, %s26
      %s36 = scalar_select %p33, %s35, %s26
      %p37 = scmp.ge.s32.totalorder %s36, 2
      %s38 = scalar_select %p37, 0, %s36
      %s39 = ssub.s32 %s26, %s38
      %p40 = scmp.eq.s32.totalorder %s39, 0
      %s42 = sadd.s32 %s41, 1
      %s43 = scalar_select %p40, %s41, %s42
      %p46 = pneg %p40
      %p47 = scmp.eq.s32.totalorder %s19, 3
      %p48 = por %p46, %p47
      %p49 = scmp.ne.s32.totalorder %s41, %s44
      %p50 = scmp.eq.s32.totalorder %s19, 0
      %p51 = por %p49, %p50
      %p52 = scmp.ne.s32.totalorder %s41, %s44
      %p53 = scmp.eq.s32.totalorder %s24, 3
      %p54 = por %p52, %p53
      %p55 = scmp.ne.s32.totalorder %s44, %s45
      %p56 = scmp.eq.s32.totalorder %s24, 0
      %p57 = por %p55, %p56
      %p58 = scmp.ne.s32.totalorder %s44, %s45
      %p59 = scmp.eq.s32.totalorder %s25, 3
      %p60 = por %p58, %p59
      %p62 = scmp.ne.s32.totalorder %s45, %s61
      %p63 = scmp.eq.s32.totalorder %s25, 0
      %p64 = por %p62, %p63
      %s65 = ssub.s32 %s26, %s38
      %p66 = scmp.eq.s32.totalorder %s65, 0
      %s68 = sadd.s32 %s67, 1
      %s69 = scalar_select %p66, %s67, %s68
      %p72 = pneg %p66
      %p73 = scmp.eq.s32.totalorder %s19, 3
      %p74 = por %p72, %p73
      %p75 = scmp.ne.s32.totalorder %s67, %s70
      %p76 = scmp.eq.s32.totalorder %s19, 0
      %p77 = por %p75, %p76
      %p78 = scmp.ne.s32.totalorder %s67, %s70
      %p79 = scmp.eq.s32.totalorder %s24, 3
      %p80 = por %p78, %p79
      %p81 = scmp.ne.s32.totalorder %s70, %s71
      %p82 = scmp.eq.s32.totalorder %s24, 0
      %p83 = por %p81, %p82
      %p84 = scmp.ne.s32.totalorder %s70, %s71
      %p85 = scmp.eq.s32.totalorder %s25, 3
      %p86 = por %p84, %p85
      %p88 = scmp.ne.s32.totalorder %s71, %s87
      %p89 = scmp.eq.s32.totalorder %s25, 0
      %p90 = por %p88, %p89
      %s91 = ssub.s32 %s26, %s38
      %p92 = scmp.eq.s32.totalorder %s91, 0
      %s94 = sadd.s32 %s93, 1
      %s95 = scalar_select %p92, %s93, %s94
      %p98 = pneg %p92
      %p99 = scmp.eq.s32.totalorder %s19, 3
      %p100 = por %p98, %p99
      %p101 = scmp.ne.s32.totalorder %s93, %s96
      %p102 = scmp.eq.s32.totalorder %s19, 0
      %p103 = por %p101, %p102
      %p104 = scmp.ne.s32.totalorder %s93, %s96
      %p105 = scmp.eq.s32.totalorder %s24, 3
      %p106 = por %p104, %p105
      %p107 = scmp.ne.s32.totalorder %s96, %s97
      %p108 = scmp.eq.s32.totalorder %s24, 0
      %p109 = por %p107, %p108
      %p110 = scmp.ne.s32.totalorder %s96, %s97
      %p111 = scmp.eq.s32.totalorder %s25, 3
      %p112 = por %p110, %p111
      %p114 = scmp.ne.s32.totalorder %s97, %s113
      %p115 = scmp.eq.s32.totalorder %s25, 0
      %p116 = por %p114, %p115
      %s117 = ssub.s32 %s26, %s38
      %s118 = ssub.s32 %s27, %s34
      %s119 = sor.u32 %s117, %s118
      %p120 = scmp.eq.s32.totalorder %s119, 0
      %s122 = sadd.s32 %s121, 1
      %s123 = scalar_select %p120, %s121, %s122
      %p126 = pneg %p120
      %p127 = scmp.eq.s32.totalorder %s19, 3
      %p128 = por %p126, %p127
      %p129 = scmp.ne.s32.totalorder %s121, %s124
      %p130 = scmp.eq.s32.totalorder %s19, 0
      %p131 = por %p129, %p130
      %p132 = scmp.ne.s32.totalorder %s121, %s124
      %p133 = scmp.eq.s32.totalorder %s24, 3
      %p134 = por %p132, %p133
      %p135 = scmp.ne.s32.totalorder %s124, %s125
      %p136 = scmp.eq.s32.totalorder %s24, 0
      %p137 = por %p135, %p136
      %p138 = scmp.ne.s32.totalorder %s124, %s125
      %p139 = scmp.eq.s32.totalorder %s25, 3
      %p140 = por %p138, %p139
      %p142 = scmp.ne.s32.totalorder %s125, %s141
      %p143 = scmp.eq.s32.totalorder %s25, 0
      %p144 = por %p142, %p143
      %s145 = ssub.s32 %s26, %s38
      %p146 = scmp.eq.s32.totalorder %s145, 0
      %s148 = sadd.s32 %s147, 1
      %s149 = scalar_select %p146, %s147, %s148
      %p152 = pneg %p146
      %p153 = scmp.eq.s32.totalorder %s19, 3
      %p154 = por %p152, %p153
      %p155 = scmp.ne.s32.totalorder %s147, %s150
      %p156 = scmp.eq.s32.totalorder %s19, 0
      %p157 = por %p155, %p156
      %p158 = scmp.ne.s32.totalorder %s147, %s150
      %p159 = scmp.eq.s32.totalorder %s24, 3
      %p160 = por %p158, %p159
      %p161 = scmp.ne.s32.totalorder %s150, %s151
      %p162 = scmp.eq.s32.totalorder %s24, 0
      %p163 = por %p161, %p162
      %p164 = scmp.ne.s32.totalorder %s150, %s151
      %p165 = scmp.eq.s32.totalorder %s25, 3
      %p166 = por %p164, %p165
      %p168 = scmp.ne.s32.totalorder %s151, %s167
      %p169 = scmp.eq.s32.totalorder %s25, 0
      %p170 = por %p168, %p169
      %p171 = scmp.le.s32.totalorder 1, %s19
      %p172 = scmp.lt.s32.totalorder %s19, 5
      %p173 = pnand %p171, %p172
      %p174 = pneg %p173
      // Predicated region
      $region9: #{tpu_custom_call.1} parent=5 // pred_check
        _
      $region10: #{tpu_custom_call.1} parent=5 // pred_check_branch
        %176 = sbr.rel (%p173) target = $region12
      $region11: #{tpu_custom_call.1} parent=5 // pred_region
        %s177 = ssub.s32 %s19, 1
      $region12: #{tpu_custom_call.1} parent=5 // pred_fallthru
        _
      %p178 = scmp.lt.s32.totalorder %s19, 4
      // Predicated region
      $region13: #{tpu_custom_call.1} parent=5 // pred_check
        %p179 = pneg %p178
      $region14: #{tpu_custom_call.1} parent=5 // pred_check_branch
        %181 = sbr.rel (%p179) target = $region16
      $region15: #{tpu_custom_call.1} parent=5 // pred_region
        // Predicated region
        $region17: #{tpu_custom_call.1} parent=15 // pred_check
          %p182 = pneg %p51
        $region18: #{tpu_custom_call.1} parent=15 // pred_check_branch
          %184 = sbr.rel (%p182) target = $region20
        $region19: #{tpu_custom_call.1} parent=15 // pred_region
          %s185 = sand.u32 %s41, 1
          %s186 = scalar_lea.sflag [#allocation4], %s185
          %s187 = sand.u32 %s41, 1
          %s188 = smul.addr %s187, 8
          %s189 = scalar_lea.vmem [#allocation3], %s188
          %s191 = ssub.s32 128, 128
          %192 = vsyncadd %s186, %s191
          %s193 = smul.addr %s26, 128
          %s194 = scalar_lea.hbm %s0, %s193
          %s196 = sshll.u32 %s189, 4
          %s197 = int_to_ptr.vmem [resolvable:$true] %s196
          %199 = dma.hbm_to_vmem [thread:$0]  %s194, 128, %s197, %s186
        $region20: #{tpu_custom_call.1} parent=15 // pred_fallthru
          _
        // Predicated region
        $region21: #{tpu_custom_call.1} parent=15 // pred_check
          %p200 = pneg %p77
        $region22: #{tpu_custom_call.1} parent=15 // pred_check_branch
          %202 = sbr.rel (%p200) target = $region24
        $region23: #{tpu_custom_call.1} parent=15 // pred_region
          %s203 = sand.u32 %s19, 1
          %s204 = scalar_lea.sflag [#allocation6], %s203
          %s205 = sand.u32 %s67, 1
          %s206 = smul.addr %s205, 8
          %s207 = scalar_lea.vmem [#allocation5], %s206
          %s209 = ssub.s32 128, 128
          %210 = vsyncadd %s204, %s209
          %s211 = smul.addr %s26, 128
          %s212 = scalar_lea.hbm %s1, %s211
          %s214 = sshll.u32 %s207, 4
          %s215 = int_to_ptr.vmem [resolvable:$true] %s214
          %217 = dma.hbm_to_vmem [thread:$0]  %s212, 128, %s215, %s204
        $region24: #{tpu_custom_call.1} parent=15 // pred_fallthru
          _
        // Predicated region
        $region25: #{tpu_custom_call.1} parent=15 // pred_check
          %p218 = pneg %p103
        $region26: #{tpu_custom_call.1} parent=15 // pred_check_branch
          %220 = sbr.rel (%p218) target = $region28
        $region27: #{tpu_custom_call.1} parent=15 // pred_region
          %s221 = sand.u32 %s19, 1
          %s222 = scalar_lea.sflag [#allocation6], %s221
          %s223 = sand.u32 %s93, 1
          %s224 = smul.addr %s223, 8
          %s225 = scalar_lea.vmem [#allocation7], %s224
          %s226 = smul.u32 8, %s26
          %s228 = ssub.s32 128, 128
          %229 = vsyncadd %s222, %s228
          %s230 = smul.addr %s226, 16
          %s231 = scalar_lea.hbm %s2, %s230
          %s232 = sshll.u32 %s225, 4
          %s233 = int_to_ptr.vmem [resolvable:$true] %s232
          %238 = dma.hbm_to_vmem [thread:$0]  %s231, 128, %s233, %s222, 16, 16, 1
        $region28: #{tpu_custom_call.1} parent=15 // pred_fallthru
          _
        // Predicated region
        $region29: #{tpu_custom_call.1} parent=15 // pred_check
          %p239 = pneg %p131
        $region30: #{tpu_custom_call.1} parent=15 // pred_check_branch
          %241 = sbr.rel (%p239) target = $region32
        $region31: #{tpu_custom_call.1} parent=15 // pred_region
          %s242 = sand.u32 %s121, 1
          %s243 = scalar_lea.sflag [#allocation9], %s242
          %s244 = sand.u32 %s121, 1
          %s245 = smul.addr %s244, 64
          %s246 = scalar_lea.vmem [#allocation8], %s245
          %s247 = smul.u32 8, %s26
          %s249 = ssub.s32 1024, 1024
          %250 = vsyncadd %s243, %s249
          %s251 = smul.addr %s247, 2
          %s252 = sadd.s32 %s27, %s251
          %s253 = smul.addr %s252, 128
          %s254 = scalar_lea.hbm %s3, %s253
          %s255 = sshll.u32 %s246, 4
          %s256 = int_to_ptr.vmem [resolvable:$true] %s255
          %261 = dma.hbm_to_vmem [thread:$0]  %s254, 1024, %s256, %s243, 256, 128, 8
        $region32: #{tpu_custom_call.1} parent=15 // pred_fallthru
          _
      $region16: #{tpu_custom_call.1} parent=5 // pred_fallthru
        _
      %p262 = scmp.le.s32.totalorder 1, %s19
      %p263 = scmp.lt.s32.totalorder %s19, 5
      %p264 = pnand %p262, %p263
      %p265 = pneg %p264
      // Predicated region
      $region33: #{tpu_custom_call.1} parent=5 // pred_check
        _
      $region34: #{tpu_custom_call.1} parent=5 // pred_check_branch
        %267 = sbr.rel (%p264) target = $region36
      $region35: #{tpu_custom_call.1} parent=5 // pred_region
        %s268 = ssub.s32 %s19, 1
        %s269 = sand.u32 %s44, 1
        %s270 = scalar_lea.sflag [#allocation4], %s269
        %s271 = sand.u32 %s44, 1
        %s272 = smul.addr %s271, 8
        %s273 = scalar_lea.vmem [#allocation3], %s272
        // Predicated region
        $region37: #{tpu_custom_call.1} parent=35 // pred_check
          %p274 = pneg %p57
        $region38: #{tpu_custom_call.1} parent=35 // pred_check_branch
          %276 = sbr.rel (%p274) target = $region40
        $region39: #{tpu_custom_call.1} parent=35 // pred_region
          %277 = dma.done %s270, 128
        $region40: #{tpu_custom_call.1} parent=35 // pred_fallthru
          _
        %s278 = sand.u32 %s24, 1
        %s279 = scalar_lea.sflag [#allocation6], %s278
        %s280 = sand.u32 %s70, 1
        %s281 = smul.addr %s280, 8
        %s282 = scalar_lea.vmem [#allocation5], %s281
        // Predicated region
        $region41: #{tpu_custom_call.1} parent=35 // pred_check
          %p283 = pneg %p83
        $region42: #{tpu_custom_call.1} parent=35 // pred_check_branch
          %285 = sbr.rel (%p283) target = $region44
        $region43: #{tpu_custom_call.1} parent=35 // pred_region
          %286 = dma.done %s279, 128
        $region44: #{tpu_custom_call.1} parent=35 // pred_fallthru
          _
        %s287 = sand.u32 %s24, 1
        %s288 = scalar_lea.sflag [#allocation6], %s287
        %s289 = sand.u32 %s96, 1
        %s290 = smul.addr %s289, 8
        %s291 = scalar_lea.vmem [#allocation7], %s290
        // Predicated region
        $region45: #{tpu_custom_call.1} parent=35 // pred_check
          %p292 = pneg %p109
        $region46: #{tpu_custom_call.1} parent=35 // pred_check_branch
          %294 = sbr.rel (%p292) target = $region48
        $region47: #{tpu_custom_call.1} parent=35 // pred_region
          %295 = dma.done %s288, 128
        $region48: #{tpu_custom_call.1} parent=35 // pred_fallthru
          _
        %s296 = sand.u32 %s124, 1
        %s297 = scalar_lea.sflag [#allocation9], %s296
        %s298 = sand.u32 %s124, 1
        %s299 = smul.addr %s298, 64
        %s300 = scalar_lea.vmem [#allocation8], %s299
        // Predicated region
        $region49: #{tpu_custom_call.1} parent=35 // pred_check
          %p301 = pneg %p137
        $region50: #{tpu_custom_call.1} parent=35 // pred_check_branch
          %303 = sbr.rel (%p301) target = $region52
        $region51: #{tpu_custom_call.1} parent=35 // pred_region
          %304 = dma.done %s297, 1024
        $region52: #{tpu_custom_call.1} parent=35 // pred_fallthru
          _
        %s305 = sand.u32 %s44, 1
        %s306 = scalar_lea.sflag [#allocation4], %s305
        %s307 = sand.u32 %s44, 1
        %s308 = smul.addr %s307, 8
        %s309 = scalar_lea.vmem [#allocation3], %s308
        %p310 = pneg %p57
        %p311 = pneg %p54
        %s312 = sand.u32 %s24, 1
        %s313 = scalar_lea.sflag [#allocation6], %s312
        %s314 = sand.u32 %s70, 1
        %s315 = smul.addr %s314, 8
        %s316 = scalar_lea.vmem [#allocation5], %s315
        %p317 = pneg %p83
        %p318 = pneg %p80
        %s319 = sand.u32 %s24, 1
        %s320 = scalar_lea.sflag [#allocation6], %s319
        %s321 = sand.u32 %s96, 1
        %s322 = smul.addr %s321, 8
        %s323 = scalar_lea.vmem [#allocation7], %s322
        %p324 = pneg %p109
        %p325 = pneg %p106
        %s326 = sand.u32 %s124, 1
        %s327 = scalar_lea.sflag [#allocation9], %s326
        %s328 = sand.u32 %s124, 1
        %s329 = smul.addr %s328, 64
        %s330 = scalar_lea.vmem [#allocation8], %s329
        %p331 = pneg %p137
        %p332 = pneg %p134
        %p333 = pneg %p163
        %p334 = pneg %p160
        %p335 = scmp.lt.s32.totalorder %s28, 1
        %s336 = scalar_select %p335, %s28, 1
        %s337 = smul.addr %s336, 8
        %s338 = scalar_lea.vmem %s4, %s337
        %s339 = smul.u32 8, %s28
        %s340 = smul.u32 8, %s28
        %p341 = scmp.lt.s32.totalorder %s28, 1
        %s342 = scalar_select %p341, %s28, 1
        %s343 = smul.addr %s342, 8
        %s344 = scalar_lea.vmem %s4, %s343
        %p345 = scmp.eq.s32.totalorder %s29, 0
        // Predicated region
        $region53: #{tpu_custom_call.1} parent=35 // pred_check
          %p346 = pneg %p345
        $region54: #{tpu_custom_call.1} parent=35 // pred_check_branch
          %348 = sbr.rel (%p346) target = $region56
        $region55: #{tpu_custom_call.1} parent=35 // pred_region
          %vm349 = vcmask 7168
          %350 = vst.msk [vmem:[#allocation2] sm:$0xff] %vm349, 0.0
        $region56: #{tpu_custom_call.1} parent=35 // pred_fallthru
          _
        %v351 = vld [vmem:[%s300] sm:$0xff]
        %v352 = vld [vmem:[%s300 + $0x8] sm:$0xff]
        %v353 = vld [vmem:[%s300 + $0x10] sm:$0xff]
        %v354 = vld [vmem:[%s300 + $0x18] sm:$0xff]
        %v355 = vld [vmem:[%s300 + $0x20] sm:$0xff]
        %v356 = vld [vmem:[%s300 + $0x28] sm:$0xff]
        %v357 = vld [vmem:[%s300 + $0x30] sm:$0xff]
        %v358 = vld [vmem:[%s300 + $0x38] sm:$0xff]
        %v359 = vld [vmem:[%s291] sm:$0x1]
        %v360 = vld [vmem:[%s291 + $0x1] sm:$0x1]
        %v361 = vld [vmem:[%s291 + $0x2] sm:$0x1]
        %v362 = vld [vmem:[%s291 + $0x3] sm:$0x1]
        %v363 = vld [vmem:[%s291 + $0x4] sm:$0x1]
        %v364 = vld [vmem:[%s291 + $0x5] sm:$0x1]
        %v365 = vld [vmem:[%s291 + $0x6] sm:$0x1]
        %v366 = vld [vmem:[%s291 + $0x7] sm:$0x1]
        %v368 = vlaneseq
        %v369 = vshrl.u32 %v368, 7
        %v370 = vsub.s32 0, %v369
        %v371 = vrot.slane %v359, %v370
        %v373 = vmul.f32 %v351, %v371
        %vm374 = vcmask 261120
        %v375 = vsel %vm374, %v373, 0.0
        %376 = vadd.xlane.f32.xlu0 %v375
        %v377 = vpop.xlane.xlu0 %376
        %v379 = vlaneseq
        %v380 = vshrl.u32 %v379, 7
        %v381 = vsub.s32 0, %v380
        %v382 = vrot.slane %v360, %v381
        %v384 = vmul.f32 %v352, %v382
        %v385 = vsel %vm374, %v384, 0.0
        %386 = vadd.xlane.f32.xlu0 %v385
        %v387 = vpop.xlane.xlu0 %386
        %v389 = vlaneseq
        %v390 = vshrl.u32 %v389, 7
        %v391 = vsub.s32 0, %v390
        %v392 = vrot.slane %v361, %v391
        %v394 = vmul.f32 %v353, %v392
        %v395 = vsel %vm374, %v394, 0.0
        %396 = vadd.xlane.f32.xlu0 %v395
        %v397 = vpop.xlane.xlu0 %396
        %v399 = vlaneseq
        %v400 = vshrl.u32 %v399, 7
        %v401 = vsub.s32 0, %v400
        %v402 = vrot.slane %v362, %v401
        %v404 = vmul.f32 %v354, %v402
        %v405 = vsel %vm374, %v404, 0.0
        %406 = vadd.xlane.f32.xlu0 %v405
        %v407 = vpop.xlane.xlu0 %406
        %v409 = vlaneseq
        %v410 = vshrl.u32 %v409, 7
        %v411 = vsub.s32 0, %v410
        %v412 = vrot.slane %v363, %v411
        %v414 = vmul.f32 %v355, %v412
        %v415 = vsel %vm374, %v414, 0.0
        %416 = vadd.xlane.f32.xlu0 %v415
        %v417 = vpop.xlane.xlu0 %416
        %v419 = vlaneseq
        %v420 = vshrl.u32 %v419, 7
        %v421 = vsub.s32 0, %v420
        %v422 = vrot.slane %v364, %v421
        %v424 = vmul.f32 %v356, %v422
        %v425 = vsel %vm374, %v424, 0.0
        %426 = vadd.xlane.f32.xlu0 %v425
        %v427 = vpop.xlane.xlu0 %426
        %v429 = vlaneseq
        %v430 = vshrl.u32 %v429, 7
        %v431 = vsub.s32 0, %v430
        %v432 = vrot.slane %v365, %v431
        %v434 = vmul.f32 %v357, %v432
        %v435 = vsel %vm374, %v434, 0.0
        %436 = vadd.xlane.f32.xlu0 %v435
        %v437 = vpop.xlane.xlu0 %436
        %v439 = vlaneseq
        %v440 = vshrl.u32 %v439, 7
        %v441 = vsub.s32 0, %v440
        %v442 = vrot.slane %v366, %v441
        %v444 = vmul.f32 %v358, %v442
        %v445 = vsel %vm374, %v444, 0.0
        %446 = vadd.xlane.f32.xlu0 %v445
        %v447 = vpop.xlane.xlu0 %446
        %v448 = vld [vmem:[#allocation2] sm:$0xff]
        %v449 = vmul.f32 %v377, 5.0
        %v450 = vmul.f32 %v387, 5.0
        %v451 = vmul.f32 %v397, 5.0
        %v452 = vmul.f32 %v407, 5.0
        %v453 = vmul.f32 %v417, 5.0
        %v454 = vmul.f32 %v427, 5.0
        %v455 = vmul.f32 %v437, 5.0
        %v456 = vmul.f32 %v447, 5.0
        %v457 = vmul.f32 %v449, 1.442695
        %v458 = vpow.pop %v457
        %v459 = vmul.f32 %v450, 1.442695
        %v460 = vpow.pop %v459
        %v461 = vmul.f32 %v451, 1.442695
        %v462 = vpow.pop %v461
        %v463 = vmul.f32 %v452, 1.442695
        %v464 = vpow.pop %v463
        %v465 = vmul.f32 %v453, 1.442695
        %v466 = vpow.pop %v465
        %v467 = vmul.f32 %v454, 1.442695
        %v468 = vpow.pop %v467
        %v469 = vmul.f32 %v455, 1.442695
        %v470 = vpow.pop %v469
        %v471 = vmul.f32 %v456, 1.442695
        %v472 = vpow.pop %v471
        %vm473 = vcmask 7168
        %v474 = vsel %vm473, %v458, 0.0
        %v475 = vrot.slane %v474, 4
        %v476 = vadd.f32 %v474, %v475
        %v477 = vrot.slane %v476, 2
        %v478 = vadd.f32 %v476, %v477
        %v479 = vrot.slane %v478, 1
        %v480 = vadd.f32 %v478, %v479
        %v481 = vsel %vm473, %v460, 0.0
        %v482 = vrot.slane %v481, 4
        %v483 = vadd.f32 %v481, %v482
        %v484 = vrot.slane %v483, 2
        %v485 = vadd.f32 %v483, %v484
        %v486 = vrot.slane %v485, 1
        %v487 = vadd.f32 %v485, %v486
        %v488 = vsel %vm473, %v462, 0.0
        %v489 = vrot.slane %v488, 4
        %v490 = vadd.f32 %v488, %v489
        %v491 = vrot.slane %v490, 2
        %v492 = vadd.f32 %v490, %v491
        %v493 = vrot.slane %v492, 1
        %v494 = vadd.f32 %v492, %v493
        %v495 = vsel %vm473, %v464, 0.0
        %v496 = vrot.slane %v495, 4
        %v497 = vadd.f32 %v495, %v496
        %v498 = vrot.slane %v497, 2
        %v499 = vadd.f32 %v497, %v498
        %v500 = vrot.slane %v499, 1
        %v501 = vadd.f32 %v499, %v500
        %v502 = vsel %vm473, %v466, 0.0
        %v503 = vrot.slane %v502, 4
        %v504 = vadd.f32 %v502, %v503
        %v505 = vrot.slane %v504, 2
        %v506 = vadd.f32 %v504, %v505
        %v507 = vrot.slane %v506, 1
        %v508 = vadd.f32 %v506, %v507
        %v509 = vsel %vm473, %v468, 0.0
        %v510 = vrot.slane %v509, 4
        %v511 = vadd.f32 %v509, %v510
        %v512 = vrot.slane %v511, 2
        %v513 = vadd.f32 %v511, %v512
        %v514 = vrot.slane %v513, 1
        %v515 = vadd.f32 %v513, %v514
        %v516 = vsel %vm473, %v470, 0.0
        %v517 = vrot.slane %v516, 4
        %v518 = vadd.f32 %v516, %v517
        %v519 = vrot.slane %v518, 2
        %v520 = vadd.f32 %v518, %v519
        %v521 = vrot.slane %v520, 1
        %v522 = vadd.f32 %v520, %v521
        %v523 = vsel %vm473, %v472, 0.0
        %v524 = vrot.slane %v523, 4
        %v525 = vadd.f32 %v523, %v524
        %v526 = vrot.slane %v525, 2
        %v527 = vadd.f32 %v525, %v526
        %v528 = vrot.slane %v527, 1
        %v529 = vadd.f32 %v527, %v528
        %vm538 = vcmask 1041409
        %v539 = vsel %vm538, %v487, %v480
        %vm540 = vcmask 1042434
        %v541 = vsel %vm540, %v494, %v539
        %vm542 = vcmask 1043459
        %v543 = vsel %vm542, %v501, %v541
        %vm544 = vcmask 1044484
        %v545 = vsel %vm544, %v508, %v543
        %vm546 = vcmask 1045509
        %v547 = vsel %vm546, %v515, %v545
        %vm548 = vcmask 1046534
        %v549 = vsel %vm548, %v522, %v547
        %vm550 = vcmask 1047559
        %v551 = vsel %vm550, %v529, %v549
        %v553 = vadd.f32 %v448, %v551
        %554 = vst.msk [vmem:[#allocation2] sm:$0xff] %vm473, %v553
        %p555 = scmp.eq.s32.totalorder %s29, 1
        // Predicated region
        $region57: #{tpu_custom_call.1} parent=35 // pred_check
          %p556 = pneg %p555
        $region58: #{tpu_custom_call.1} parent=35 // pred_check_branch
          %558 = sbr.rel (%p556) target = $region60
        $region59: #{tpu_custom_call.1} parent=35 // pred_region
          %v559 = vld [vmem:[%s273] sm:$0xff]
          %v560 = vld [vmem:[%s282] sm:$0xff]
          %v561 = vmul.f32 %v559, %v559
          %v562 = vsel %vm374, %v561, 0.0
          %563 = vadd.xlane.f32.xlu0 %v562
          %v564 = vpop.xlane.xlu0 %563
          %v565 = vmul.f32 %v560, %v560
          %v566 = vsel %vm374, %v565, 0.0
          %567 = vadd.xlane.f32.xlu0 %v566
          %v568 = vpop.xlane.xlu0 %567
          %v569 = vmul.f32 %v559, %v560
          %v570 = vsel %vm374, %v569, 0.0
          %571 = vadd.xlane.f32.xlu0 %v570
          %v572 = vpop.xlane.xlu0 %571
          %v573 = vmul.f32 %v564, %v568
          %v574 = vmax.f32 %v573, 1e-16
          %v575 = vrsqrt.pop %v574
          %v576 = vmul.f32 %v572, %v575
          %v577 = vmul.f32 %v576, 5.0
          %v578 = vmul.f32 %v577, 1.442695
          %v579 = vpow.pop %v578
          %v580 = vld [vmem:[#allocation2] sm:$0xff]
          %v581 = vadd.f32 %v579, %v580
          %v582 = vlog2.pop %v581
          %v583 = vmul.f32 %v582, 0.6931472
          %v584 = vsub.f32 %v583, %v577
          %585 = vst.msk [vmem:[%s344] sm:$0xff] %vm473, %v584
        $region60: #{tpu_custom_call.1} parent=35 // pred_fallthru
          _
        %p586 = scmp.lt.s32.totalorder %s28, 1
        %s587 = scalar_select %p586, %s28, 1
        %s588 = smul.addr %s587, 8
        %s589 = scalar_lea.vmem %s4, %s588
        // Predicated region
        $region61: #{tpu_custom_call.1} parent=35 // pred_check
          %p590 = pneg %p160
        $region62: #{tpu_custom_call.1} parent=35 // pred_check_branch
          %592 = sbr.rel (%p590) target = $region64
        $region63: #{tpu_custom_call.1} parent=35 // pred_region
          _
        $region64: #{tpu_custom_call.1} parent=35 // pred_fallthru
          _
      $region36: #{tpu_custom_call.1} parent=5 // pred_fallthru
        _
      %p593 = scmp.le.s32.totalorder 2, %s19
      // Predicated region
      $region65: #{tpu_custom_call.1} parent=5 // pred_check
        %p594 = pneg %p593
      $region66: #{tpu_custom_call.1} parent=5 // pred_check_branch
        %596 = sbr.rel (%p594) target = $region68
      $region67: #{tpu_custom_call.1} parent=5 // pred_region
        %s597 = ssub.s32 %s19, 2
        // Predicated region
        $region69: #{tpu_custom_call.1} parent=67 // pred_check
          %p598 = pneg %p166
        $region70: #{tpu_custom_call.1} parent=67 // pred_check_branch
          %600 = sbr.rel (%p598) target = $region72
        $region71: #{tpu_custom_call.1} parent=67 // pred_region
          %p601 = scmp.lt.s32.totalorder %s30, 1
          %s602 = scalar_select %p601, %s30, 1
          %s603 = smul.addr %s602, 8
          %s604 = scalar_lea.vmem %s4, %s603
        $region72: #{tpu_custom_call.1} parent=67 // pred_fallthru
          _
      $region68: #{tpu_custom_call.1} parent=5 // pred_fallthru
        _
    $region6: #{tpu_custom_call.1} parent=1 // loop_footer
      %s23 = sadd.s32 1, %s19
    $region7: #{tpu_custom_call.1} parent=1 // loop_footer_branch
      %18 = sbr.rel target = $region3
    $region8: #{tpu_custom_call.1} parent=1 // loop_exit
      _
    %605 = vsyncpa [#allocation4], 1
    %s606 = scalar_lea.sflag [#allocation4], 1
    %607 = vsyncpa %s606, 1
    %608 = vsyncpa [#allocation6], 1
    %s609 = scalar_lea.sflag [#allocation6], 1
    %610 = vsyncpa %s609, 1
    %611 = vsyncpa [#allocation9], 1
    %s612 = scalar_lea.sflag [#allocation9], 1
    %613 = vsyncpa %s612, 1

</llo_original>
